<compile_context>
chip_gen: v7x
topology: tpu7x:2x2x1
jax: 0.10.0
libtpu: 0.0.40
codegen_flags: <defaults>
</compile_context>

<pallas_src>
import functools

import jax
import jax.numpy as jnp
from jax import lax
from jax.experimental import pallas as pl
from jax.experimental.pallas import tpu as pltpu

_LANES = 128


def _round_up(v, m):
    return ((v + m - 1) // m) * m


def _sublane_multiple(dtype) -> int:
    itemsize = jnp.dtype(dtype).itemsize
    return max(8, 8 * (4 // max(itemsize, 1)))


def _num_tensorcores() -> int:
    """Best-effort TensorCore count per device (megacore / v7x -> 2)."""
    try:
        info = pltpu.get_tpu_info()
        for attr in ("num_cores", "num_tensorcores", "tensorcores_per_chip",
                     "cores_per_chip"):
            n = getattr(info, attr, None)
            if n:
                return max(1, min(int(n), 2))
    except Exception:
        pass
    try:
        kind = jax.devices()[0].device_kind.lower()
        if any(tag in kind for tag in ("v4", "v5p", "7x", "tpu7")):
            return 2
    except Exception:
        pass
    return 1


def _vmem_capacity_bytes() -> int:
    """Best-effort per-core VMEM capacity; conservative fallback = v7x 64 MiB."""
    try:
        info = pltpu.get_tpu_info()
        v = getattr(info, "vmem_capacity_bytes", None)
        if v:
            return int(v)
    except Exception:
        pass
    return 64 << 20


def _column_split(n_num, n_cat):
    """Static 128-lane-aligned split of the feature axis.

    Returns (mse_end, bce_start):
      [0, mse_end)         -> numeric-only lanes (pure MSE, no mask, no logs)
      [mse_end, bce_start) -> straddling lane group (needs a per-lane mask)
      [bce_start, D)       -> categorical-only lanes (pure BCE, no mask)
    """
    D = n_num + n_cat
    if n_cat == 0:
        return D, D
    if n_num == 0:
        return 0, 0
    mse_end = (n_num // _LANES) * _LANES
    bce_start = min(_round_up(n_num, _LANES), D)
    return mse_end, bce_start


def _loss_kernel(x_ref, y_ref, out_ref, acc_ref, *,
                 batch, n_num, n_cat, c, tile_b, tiles_per_part, n_grid_tiles):
    p = pl.program_id(0)           # parallel (core-split) axis
    i = pl.program_id(1)           # reduction axis over batch tiles
    n_inner = pl.num_programs(1)

    D = n_num + n_cat
    mse_end, bce_start = _column_split(n_num, n_cat)
    straddle = bce_start - mse_end

    n_tiles = -(-batch // tile_b)
    n_full = batch // tile_b
    rem = batch - n_full * tile_b          # rows in the ragged last tile

    tile_idx = p * tiles_per_part + i

    @pl.when(i == 0)
    def _init():
        acc_ref[0] = jnp.float32(0.0)
        acc_ref[1] = jnp.float32(0.0)

    def bce_terms(xc, yc):
        # BCE(input=yc, target=xc) with PyTorch-style -100 clamp on the logs:
        #   -(x*log(y) + (1-x)*log(1-y)) == -(x*(log(y)-log(1-y)) + log(1-y))
        log_p = jnp.maximum(jnp.log(yc), jnp.float32(-100.0))
        log_1mp = jnp.maximum(jnp.log(1.0 - yc), jnp.float32(-100.0))
        return -(xc * (log_p - log_1mp) + log_1mp)

    def accumulate(ragged):
        if ragged:
            rmask = lax.broadcasted_iota(jnp.int32, (tile_b, 1), 0) < rem
        sq_sum = None
        bce_sum = None

        if mse_end > 0:                          # numeric-only lanes
            xm = x_ref[:, :mse_end].astype(jnp.float32)
            ym = y_ref[:, :mse_end].astype(jnp.float32)
            d = ym - xm
            sq = d * d
            if ragged:
                sq = jnp.where(rmask, sq, jnp.float32(0.0))
            sq_sum = jnp.sum(sq)

        if bce_start < D:                        # categorical-only lanes
            xc = x_ref[:, bce_start:].astype(jnp.float32)
            yc = y_ref[:, bce_start:].astype(jnp.float32)
            b = bce_terms(xc, yc)
            if ragged:
                b = jnp.where(rmask, b, jnp.float32(0.0))
            bce_sum = jnp.sum(b)

        if straddle > 0:                         # single straddling lane group
            xs = x_ref[:, mse_end:bce_start].astype(jnp.float32)
            ys = y_ref[:, mse_end:bce_start].astype(jnp.float32)
            col = lax.broadcasted_iota(jnp.int32, (1, straddle), 1) + mse_end
            is_num = col < n_num                 # (1, w): broadcast over rows
            d = ys - xs
            sq = jnp.where(is_num, d * d, jnp.float32(0.0))
            ysafe = jnp.where(is_num, jnp.float32(0.5), ys)  # keep log args in (0,1)
            b = jnp.where(is_num, jnp.float32(0.0), bce_terms(xs, ysafe))
            if ragged:
                sq = jnp.where(rmask, sq, jnp.float32(0.0))
                b = jnp.where(rmask, b, jnp.float32(0.0))
            s_sq = jnp.sum(sq)
            s_b = jnp.sum(b)
            sq_sum = s_sq if sq_sum is None else sq_sum + s_sq
            bce_sum = s_b if bce_sum is None else bce_sum + s_b

        if sq_sum is not None:
            acc_ref[0] += sq_sum
        if bce_sum is not None:
            acc_ref[1] += bce_sum

    always_full = (rem == 0) and (n_grid_tiles == n_tiles)
    if always_full:
        accumulate(False)                        # no row mask on the hot path
    else:
        if n_full > 0:
            @pl.when(tile_idx < n_full)          # full interior tiles: no mask
            def _full_tiles():
                accumulate(False)
        if rem > 0:
            @pl.when(tile_idx == n_full)         # ragged last tile: row mask
            def _ragged_tile():
                accumulate(True)
        # Clamped overflow tiles (tile_idx >= n_tiles) do no work at all.

    @pl.when(i == n_inner - 1)
    def _finalize():
        w_num = jnp.float32(1.0 / (batch * n_num)) if n_num > 0 else jnp.float32(0.0)
        w_cat = jnp.float32(c / (batch * n_cat)) if n_cat > 0 else jnp.float32(0.0)
        out_ref[0, 0] = w_num * acc_ref[0] + w_cat * acc_ref[1]


def autoencoder_loss_v2(x, y, *, n_cat_features, c=1.0, tile_b=None,
                        force_n_par=None):
    """Pallas implementation of AutoEncoderLoss_v2.forward. Returns a scalar f32."""
    assert x.shape == y.shape and x.ndim == 2
    B, D = x.shape
    assert B > 0 and D > 0
    n_cat = int(n_cat_features)
    n_num = D - n_cat
    assert 0 <= n_cat <= D

    itemsize = jnp.dtype(x.dtype).itemsize
    sub = _sublane_multiple(x.dtype)
    vmem_cap = _vmem_capacity_bytes()

    if tile_b is None:
        # 2 inputs x 2 pipeline buffers; keep the total well under the smallest
        # per-TC VMEM (v7x: 64 MiB) while targeting multi-MiB blocks so the
        # ~0.35 us per-grid-step overhead stays negligible.
        total_cap = min(int(vmem_cap * 0.6), 48 << 20)
        block_bytes = min(8 << 20, max(2 << 20, total_cap // 4))
        tile_b = max(sub, (block_bytes // max(D * itemsize, 1)) // sub * sub)
    tile_b = max(sub, _round_up(int(tile_b), sub))
    if B >= sub:
        tile_b = min(tile_b, (B // sub) * sub)   # avoid a block larger than B

    n_tiles = pl.cdiv(B, tile_b)
    n_cores = _num_tensorcores() if force_n_par is None else int(force_n_par)
    n_par = n_cores if (n_cores > 1 and n_tiles >= n_cores) else 1
    tiles_per_part = pl.cdiv(n_tiles, n_par)
    n_grid_tiles = n_par * tiles_per_part

    def in_map(p, i):
        # Clamp overflow tiles (when n_tiles % n_par != 0); the kernel skips
        # their compute entirely via pl.when phase gating.
        t = p * tiles_per_part + i
        return (jnp.minimum(t, n_tiles - 1), 0)

    kernel = functools.partial(
        _loss_kernel, batch=B, n_num=n_num, n_cat=n_cat, c=float(c),
        tile_b=tile_b, tiles_per_part=tiles_per_part, n_grid_tiles=n_grid_tiles)

    mse_end, _ = _column_split(n_num, n_cat)
    block_bytes_actual = tile_b * D * itemsize
    vmem_limit = 4 * block_bytes_actual + (4 << 20)
    vmem_limit = max(vmem_limit, 16 << 20)
    vmem_limit = min(vmem_limit, max(16 << 20, vmem_cap - (8 << 20)))

    cost = pl.CostEstimate(
        flops=B * (3 * n_num + 8 * n_cat),
        transcendentals=2 * B * (D - mse_end),   # logs only on cat+straddle lanes
        bytes_accessed=2 * B * D * itemsize + n_par * 4,
    )

    partials = pl.pallas_call(
        kernel,
        out_shape=jax.ShapeDtypeStruct((n_par, 1), jnp.float32),
        grid_spec=pltpu.PrefetchScalarGridSpec(
            num_scalar_prefetch=0,
            grid=(n_par, tiles_per_part),
            in_specs=[
                pl.BlockSpec((tile_b, D), in_map),
                pl.BlockSpec((tile_b, D), in_map),
            ],
            out_specs=pl.BlockSpec((1, 1), lambda p, i: (p, 0),
                                   memory_space=pltpu.MemorySpace.SMEM),
            scratch_shapes=[pltpu.SMEM((2,), jnp.float32)],
        ),
        compiler_params=pltpu.CompilerParams(
            dimension_semantics=("parallel", "arbitrary"),
            vmem_limit_bytes=int(vmem_limit)),
        cost_estimate=cost,
    )(x, y)
    return jnp.sum(partials)


def _reference(x, y, n_cat, c):
    x = x.astype(jnp.float32)
    y = y.astype(jnp.float32)
    D = x.shape[1]
    n_num = D - n_cat
    loss = jnp.float32(0.0)
    if n_num > 0:
        loss = loss + jnp.mean((y[:, :n_num] - x[:, :n_num]) ** 2)
    if n_cat > 0:
        cx, cy = x[:, n_num:], y[:, n_num:]
        lp = jnp.maximum(jnp.log(cy), -100.0)
        l1 = jnp.maximum(jnp.log(1.0 - cy), -100.0)
        loss = loss + c * jnp.mean(-(cx * lp + (1.0 - cx) * l1))
    return loss


def _make_inputs(key, B, D, n_cat):
    k1, k2, k3, k4 = jax.random.split(key, 4)
    n_num = D - n_cat
    num_x = jax.random.normal(k1, (B, n_num), dtype=jnp.float32)
    num_y = jax.random.normal(k2, (B, n_num), dtype=jnp.float32)
    cat_x = jax.random.uniform(k3, (B, n_cat), dtype=jnp.float32,
                               minval=0.01, maxval=0.99)
    cat_y = jax.random.uniform(k4, (B, n_cat), dtype=jnp.float32,
                               minval=0.01, maxval=0.99)
    x = jnp.concatenate([num_x, cat_x], axis=1)
    y = jnp.concatenate([num_y, cat_y], axis=1)
    return x, y


if __name__ == "__main__":
    key = jax.random.PRNGKey(0)
    ks = jax.random.split(key, 6)

    # Case 1: D=128, n_cat=32, tile_b=8 -> 4 batch tiles; exercises the
    # straddling lane group (n_num=96 is not 128-aligned), cross-tile
    # accumulation, and the core split on multi-TC chips.
    x, y = _make_inputs(ks[0], 32, 128, 32)
    out = jax.block_until_ready(
        autoencoder_loss_v2(x, y, n_cat_features=32, c=1.0, tile_b=8))
    ref = _reference(x, y, 32, 1.0)
    assert jnp.allclose(out, ref, rtol=5e-5, atol=1e-5), (out, ref)

    # Case 2: B=27 with tile_b=8 -> ragged last tile (row-masked phase).
    x, y = _make_inputs(ks[1], 27, 128, 32)
    out = jax.block_until_ready(
        autoencoder_loss_v2(x, y, n_cat_features=32, c=0.5, tile_b=8))
    ref = _reference(x, y, 32, 0.5)
    assert jnp.allclose(out, ref, rtol=5e-5, atol=1e-5), (out, ref)

    # Case 3: forced 2-way core split with an odd tile count -> exercises the
    # clamped overflow tile (skipped entirely via phase gating).
    x, y = _make_inputs(ks[2], 24, 128, 32)
    out = jax.block_until_ready(
        autoencoder_loss_v2(x, y, n_cat_features=32, c=1.0, tile_b=8,
                            force_n_par=2))
    ref = _reference(x, y, 32, 1.0)
    assert jnp.allclose(out, ref, rtol=5e-5, atol=1e-5), (out, ref)

    # Case 4: auto tile size; D not a multiple of 128; aligned MSE region plus
    # straddling group; full + ragged tile mix; non-default c.
    x, y = _make_inputs(ks[3], 300, 200, 40)
    out = jax.block_until_ready(
        autoencoder_loss_v2(x, y, n_cat_features=40, c=2.0))
    ref = _reference(x, y, 40, 2.0)
    assert jnp.allclose(out, ref, rtol=5e-5, atol=1e-5), (out, ref)

    # Case 5: numeric-only (n_cat_features == 0).
    x, y = _make_inputs(ks[4], 16, 128, 0)
    out = jax.block_until_ready(
        autoencoder_loss_v2(x, y, n_cat_features=0, c=1.0))
    ref = _reference(x, y, 0, 1.0)
    assert jnp.allclose(out, ref, rtol=5e-5, atol=1e-5), (out, ref)

    # Case 6: categorical-only (numeric part empty).
    x, y = _make_inputs(ks[5], 16, 128, 128)
    out = jax.block_until_ready(
        autoencoder_loss_v2(x, y, n_cat_features=128, c=1.0))
    ref = _reference(x, y, 128, 1.0)
    assert jnp.allclose(out, ref, rtol=5e-5, atol=1e-5), (out, ref)

    print("KERNEL_OK")
</pallas_src>

<mosaic_0001>
module attributes {stable_mosaic.version = 11 : i64} {
  func.func @_loss_kernel(%arg0: i32, %arg1: i32, %arg2: memref<8x128xf32, #tpu.memory_space<vmem>>, %arg3: memref<8x128xf32, #tpu.memory_space<vmem>>, %arg4: memref<1x1xf32, #tpu.memory_space<smem>>, %arg5: memref<2xf32, #tpu.memory_space<smem>>) attributes {dimension_semantics = [#tpu.dimension_semantics<parallel>, #tpu.dimension_semantics<arbitrary>], iteration_bounds = array<i64: 1, 4>, scalar_prefetch = 0 : i64, scratch_operands = 1 : i64, tpu.core_type = #tpu.core_type<tc>, window_params = [{transform_indices = @transform_0, window_bounds = array<i64: 8, 128>}, {transform_indices = @transform_1, window_bounds = array<i64: 8, 128>}, {transform_indices = @transform_2, window_bounds = array<i64: 1, 1>}]} {
    %c0_i32 = arith.constant 0 : i32
    %0 = arith.cmpi eq, %arg1, %c0_i32 : i32
    %1 = arith.extui %0 : i1 to i32
    %c0_i32_0 = arith.constant 0 : i32
    %2 = arith.cmpi ne, %1, %c0_i32_0 : i32
    scf.if %2 {
      %cst_17 = arith.constant 0.000000e+00 : f32
      %c0_18 = arith.constant 0 : index
      %54 = memref.load %arg5[%c0_18] : memref<2xf32, #tpu.memory_space<smem>>
      memref.store %cst_17, %arg5[%c0_18] : memref<2xf32, #tpu.memory_space<smem>>
      %cst_19 = arith.constant 0.000000e+00 : f32
      %c1_20 = arith.constant 1 : index
      %55 = memref.load %arg5[%c1_20] : memref<2xf32, #tpu.memory_space<smem>>
      memref.store %cst_19, %arg5[%c1_20] : memref<2xf32, #tpu.memory_space<smem>>
    } else {
    }
    %c0 = arith.constant 0 : index
    %c0_1 = arith.constant 0 : index
    %3 = vector.load %arg2[%c0, %c0_1] : memref<8x128xf32, #tpu.memory_space<vmem>>, vector<8x128xf32>
    %c0_2 = arith.constant 0 : index
    %c0_3 = arith.constant 0 : index
    %4 = vector.load %arg3[%c0_2, %c0_3] : memref<8x128xf32, #tpu.memory_space<vmem>>, vector<8x128xf32>
    %5 = tpu.iota {dimensions = array<i32: 1>} : vector<1x128xi32>
    %c0_i32_4 = arith.constant 0 : i32
    %6 = vector.broadcast %c0_i32_4 : i32 to vector<1x128xi32>
    %7 = arith.addi %5, %6 : vector<1x128xi32>
    %c96_i32 = arith.constant 96 : i32
    %8 = vector.broadcast %c96_i32 : i32 to vector<1x128xi32>
    %9 = arith.cmpi slt, %7, %8 : vector<1x128xi32>
    %10 = arith.subf %4, %3 : vector<8x128xf32>
    %11 = arith.mulf %10, %10 : vector<8x128xf32>
    %cst = arith.constant 0.000000e+00 : f32
    %12 = vector.shape_cast %9 : vector<1x128xi1> to vector<1x128xi1>
    %13 = vector.broadcast %12 : vector<1x128xi1> to vector<8x128xi1>
    %14 = vector.broadcast %cst : f32 to vector<8x128xf32>
    %15 = arith.select %13, %11, %14 : vector<8x128xi1>, vector<8x128xf32>
    %cst_5 = arith.constant 5.000000e-01 : f32
    %16 = vector.shape_cast %9 : vector<1x128xi1> to vector<1x128xi1>
    %17 = vector.broadcast %16 : vector<1x128xi1> to vector<8x128xi1>
    %18 = vector.broadcast %cst_5 : f32 to vector<8x128xf32>
    %19 = arith.select %17, %18, %4 : vector<8x128xi1>, vector<8x128xf32>
    %20 = math.log %19 : vector<8x128xf32>
    %cst_6 = arith.constant -1.000000e+02 : f32
    %21 = vector.broadcast %cst_6 : f32 to vector<8x128xf32>
    %22 = arith.maximumf %20, %21 : vector<8x128xf32>
    %cst_7 = arith.constant 1.000000e+00 : f32
    %23 = vector.broadcast %cst_7 : f32 to vector<8x128xf32>
    %24 = arith.subf %23, %19 : vector<8x128xf32>
    %25 = math.log %24 : vector<8x128xf32>
    %cst_8 = arith.constant -1.000000e+02 : f32
    %26 = vector.broadcast %cst_8 : f32 to vector<8x128xf32>
    %27 = arith.maximumf %25, %26 : vector<8x128xf32>
    %28 = arith.subf %22, %27 : vector<8x128xf32>
    %29 = arith.mulf %3, %28 : vector<8x128xf32>
    %30 = arith.addf %29, %27 : vector<8x128xf32>
    %cst_9 = arith.constant 0.000000e+00 : f32
    %31 = vector.broadcast %cst_9 : f32 to vector<8x128xf32>
    %32 = arith.subf %31, %30 : vector<8x128xf32>
    %cst_10 = arith.constant 0.000000e+00 : f32
    %33 = vector.shape_cast %9 : vector<1x128xi1> to vector<1x128xi1>
    %34 = vector.broadcast %33 : vector<1x128xi1> to vector<8x128xi1>
    %35 = vector.broadcast %cst_10 : f32 to vector<8x128xf32>
    %36 = arith.select %34, %35, %32 : vector<8x128xi1>, vector<8x128xf32>
    %37 = vector.shape_cast %15 : vector<8x128xf32> to vector<1x8x128xf32>
    %cst_11 = arith.constant dense<0.000000e+00> : vector<1xf32>
    %38 = vector.multi_reduction <add>, %37, %cst_11 [1, 2] : vector<1x8x128xf32> to vector<1xf32>
    %39 = vector.shape_cast %38 : vector<1xf32> to vector<1x1x1xf32>
    %40 = vector.extract %39[0, 0, 0] : f32 from vector<1x1x1xf32>
    %41 = vector.shape_cast %36 : vector<8x128xf32> to vector<1x8x128xf32>
    %cst_12 = arith.constant dense<0.000000e+00> : vector<1xf32>
    %42 = vector.multi_reduction <add>, %41, %cst_12 [1, 2] : vector<1x8x128xf32> to vector<1xf32>
    %43 = vector.shape_cast %42 : vector<1xf32> to vector<1x1x1xf32>
    %44 = vector.extract %43[0, 0, 0] : f32 from vector<1x1x1xf32>
    %c0_13 = arith.constant 0 : index
    %45 = memref.load %arg5[%c0_13] : memref<2xf32, #tpu.memory_space<smem>>
    %46 = arith.addf %45, %40 : f32
    %c0_14 = arith.constant 0 : index
    %47 = memref.load %arg5[%c0_14] : memref<2xf32, #tpu.memory_space<smem>>
    memref.store %46, %arg5[%c0_14] : memref<2xf32, #tpu.memory_space<smem>>
    %c1 = arith.constant 1 : index
    %48 = memref.load %arg5[%c1] : memref<2xf32, #tpu.memory_space<smem>>
    %49 = arith.addf %48, %44 : f32
    %c1_15 = arith.constant 1 : index
    %50 = memref.load %arg5[%c1_15] : memref<2xf32, #tpu.memory_space<smem>>
    memref.store %49, %arg5[%c1_15] : memref<2xf32, #tpu.memory_space<smem>>
    %c3_i32 = arith.constant 3 : i32
    %51 = arith.cmpi eq, %arg1, %c3_i32 : i32
    %52 = arith.extui %51 : i1 to i32
    %c0_i32_16 = arith.constant 0 : i32
    %53 = arith.cmpi ne, %52, %c0_i32_16 : i32
    scf.if %53 {
      %c0_17 = arith.constant 0 : index
      %54 = memref.load %arg5[%c0_17] : memref<2xf32, #tpu.memory_space<smem>>
      %cst_18 = arith.constant 3.25520843E-4 : f32
      %55 = arith.mulf %cst_18, %54 : f32
      %c1_19 = arith.constant 1 : index
      %56 = memref.load %arg5[%c1_19] : memref<2xf32, #tpu.memory_space<smem>>
      %cst_20 = arith.constant 9.765625E-4 : f32
      %57 = arith.mulf %cst_20, %56 : f32
      %58 = arith.addf %55, %57 : f32
      %c0_21 = arith.constant 0 : index
      %c0_22 = arith.constant 0 : index
      %59 = memref.load %arg4[%c0_21, %c0_22] : memref<1x1xf32, #tpu.memory_space<smem>>
      memref.store %58, %arg4[%c0_21, %c0_22] : memref<1x1xf32, #tpu.memory_space<smem>>
    } else {
    }
    return
  }
  func.func @transform_0(%arg0: i32, %arg1: i32) -> (i32, i32) {
    %c4_i32 = arith.constant 4 : i32
    %0 = arith.muli %arg0, %c4_i32 : i32
    %1 = arith.addi %0, %arg1 : i32
    %c3_i32 = arith.constant 3 : i32
    %2 = arith.minsi %1, %c3_i32 : i32
    %c0_i32 = arith.constant 0 : i32
    %c0_i32_0 = arith.constant 0 : i32
    return %2, %c0_i32 : i32, i32
  }
  func.func @transform_1(%arg0: i32, %arg1: i32) -> (i32, i32) {
    %c4_i32 = arith.constant 4 : i32
    %0 = arith.muli %arg0, %c4_i32 : i32
    %1 = arith.addi %0, %arg1 : i32
    %c3_i32 = arith.constant 3 : i32
    %2 = arith.minsi %1, %c3_i32 : i32
    %c0_i32 = arith.constant 0 : i32
    %c0_i32_0 = arith.constant 0 : i32
    return %2, %c0_i32 : i32, i32
  }
  func.func @transform_2(%arg0: i32, %arg1: i32) -> (i32, i32) {
    %c0_i32 = arith.constant 0 : i32
    %c0_i32_0 = arith.constant 0 : i32
    return %arg0, %c0_i32 : i32, i32
  }
}

</mosaic_0001>

<llo_original>
// kernel: tpu_custom_call.1
$region0: #{tpu_custom_call.1}
  #allocation0 [shape = 'u32[]', space=smem, size = 0x4, offset = 0x4, fixed_abs, tag = 'smem constant byte address 0x4 - core index']
  #allocation1 [shape = 'u32[144,128]{1,0:T(1,128)}', space=vmem, size = 0x12000, scoped, tag = 'internal scratch']
  #allocation2 [shape = 'f32[2]{0:T(128)}', space=smem, size = 0x200, scoped, tag = 'scratch operand']
  %s0 = inlined_call_operand.hbm [shape: f32[32,128], index: 0, kind: input, shape index: {}]
  %s1 = inlined_call_operand.hbm [shape: f32[32,128], index: 1, kind: input, shape index: {}]
  %s2 = inlined_call_operand.hbm [shape: f32[1,1], index: 2, kind: output, shape index: {}]
  %s3 = sld [smem:[#allocation0]]
  $region57: #{tpu_custom_call.1} parent=0
    _
  %s5 = ssub.s32 1, %s3
  %s6 = scalar_select 0, %s5, %s3
  $region1: #{tpu_custom_call.1} parent=0
    #allocation3 [shape = 'u8[8192]{0}', space=vmem, size = 0x2000, scoped, tag = 'input window, operand 0']
    #allocation4 [shape = 's32[2]{0}', space=sflag, size = 0x8, scoped, tag = 'scoped memory for tpu_custom_call.1']
    #allocation5 [shape = 's32[2]{0}', space=sflag, size = 0x8, scoped, tag = 'scoped memory for tpu_custom_call.1']
    #allocation6 [shape = 'u8[8192]{0}', space=vmem, size = 0x2000, scoped, tag = 'input window, operand 1']
    #allocation7 [shape = 's32[2]{0}', space=sflag, size = 0x8, scoped, tag = 'scoped memory for tpu_custom_call.1']
    #allocation8 [shape = 'u8[512]{0}', space=smem, size = 0x200, scoped, tag = 'output window, operand 0, single buffered']
    %7 = vsyncpa [#allocation4], 0
    %s8 = scalar_lea.sflag [#allocation4], 1
    %9 = vsyncpa %s8, 0
    %10 = vsyncpa [#allocation7], 0
    %s11 = scalar_lea.sflag [#allocation7], 1
    %12 = vsyncpa %s11, 0
    %13 = vsyncpa [#allocation5], 0
    loop: start=0, step=1, limit=6
    $region2: #{tpu_custom_call.1} parent=1 // loop_pre_header
      _
    $region3: #{tpu_custom_call.1} parent=1 // loop_header
      %s15 = sphi 0, %s19
      %p16 = scmp.ge.s32.totalorder %s15, 6
      %s22 = sphi 0, %s34
      %s23 = sphi 0, %s30
      %s24 = sphi 0, %s22
      %s25 = sphi 0, %s23
      %s26 = sphi 0, %s24
      %s27 = sphi 0, %s25
      %s45 = sphi 0, %s47
      %s48 = sphi 0, %s45
      %s49 = sphi 0, %s48
      %s65 = sphi 0, %s49
      %s79 = sphi 0, %s81
      %s82 = sphi 0, %s79
      %s83 = sphi 0, %s82
      %s99 = sphi 0, %s83
      %s105 = sphi 0, %s107
      %s108 = sphi 0, %s105
      %s109 = sphi 0, %s108
      %s125 = sphi 0, %s109
    $region4: #{tpu_custom_call.1} parent=1 // loop_header_branch
      %18 = sbr.rel (%p16) target = $region8
    $region5: #{tpu_custom_call.1} parent=1 // loop_body
      %s20 = ssub.s32 %s15, 1
      %s21 = ssub.s32 %s15, 2
      %s28 = sadd.s32 1, %s23
      %p29 = scmp.ge.s32.totalorder %s28, 4
      %s30 = scalar_select %p29, 0, %s28
      %s31 = sadd.s32 1, %s22
      %s32 = scalar_select %p29, %s31, %s22
      %p33 = scmp.ge.s32.totalorder %s32, 1
      %s34 = scalar_select %p33, 0, %s32
      %s35 = smul.u32 %s22, 4
      %s36 = sadd.s32 %s35, %s23
      %p37 = scmp.lt.s32.totalorder %s36, 3
      %s38 = scalar_select %p37, %s36, 3
      %s39 = smul.u32 %s34, 4
      %s40 = sadd.s32 %s39, %s30
      %p41 = scmp.lt.s32.totalorder %s40, 3
      %s42 = scalar_select %p41, %s40, 3
      %s43 = ssub.s32 %s38, %s42
      %p44 = scmp.eq.s32.totalorder %s43, 0
      %s46 = sadd.s32 %s45, 1
      %s47 = scalar_select %p44, %s45, %s46
      %p50 = pneg %p44
      %p51 = scmp.eq.s32.totalorder %s15, 3
      %p52 = por %p50, %p51
      %p53 = scmp.ne.s32.totalorder %s45, %s48
      %p54 = scmp.eq.s32.totalorder %s15, 0
      %p55 = por %p53, %p54
      %p56 = scmp.ne.s32.totalorder %s45, %s48
      %p57 = scmp.eq.s32.totalorder %s20, 3
      %p58 = por %p56, %p57
      %p59 = scmp.ne.s32.totalorder %s48, %s49
      %p60 = scmp.eq.s32.totalorder %s20, 0
      %p61 = por %p59, %p60
      %p62 = scmp.ne.s32.totalorder %s48, %s49
      %p63 = scmp.eq.s32.totalorder %s21, 3
      %p64 = por %p62, %p63
      %p66 = scmp.ne.s32.totalorder %s49, %s65
      %p67 = scmp.eq.s32.totalorder %s21, 0
      %p68 = por %p66, %p67
      %s69 = smul.u32 %s22, 4
      %s70 = sadd.s32 %s69, %s23
      %p71 = scmp.lt.s32.totalorder %s70, 3
      %s72 = scalar_select %p71, %s70, 3
      %s73 = smul.u32 %s34, 4
      %s74 = sadd.s32 %s73, %s30
      %p75 = scmp.lt.s32.totalorder %s74, 3
      %s76 = scalar_select %p75, %s74, 3
      %s77 = ssub.s32 %s72, %s76
      %p78 = scmp.eq.s32.totalorder %s77, 0
      %s80 = sadd.s32 %s79, 1
      %s81 = scalar_select %p78, %s79, %s80
      %p84 = pneg %p78
      %p85 = scmp.eq.s32.totalorder %s15, 3
      %p86 = por %p84, %p85
      %p87 = scmp.ne.s32.totalorder %s79, %s82
      %p88 = scmp.eq.s32.totalorder %s15, 0
      %p89 = por %p87, %p88
      %p90 = scmp.ne.s32.totalorder %s79, %s82
      %p91 = scmp.eq.s32.totalorder %s20, 3
      %p92 = por %p90, %p91
      %p93 = scmp.ne.s32.totalorder %s82, %s83
      %p94 = scmp.eq.s32.totalorder %s20, 0
      %p95 = por %p93, %p94
      %p96 = scmp.ne.s32.totalorder %s82, %s83
      %p97 = scmp.eq.s32.totalorder %s21, 3
      %p98 = por %p96, %p97
      %p100 = scmp.ne.s32.totalorder %s83, %s99
      %p101 = scmp.eq.s32.totalorder %s21, 0
      %p102 = por %p100, %p101
      %s103 = ssub.s32 %s22, %s34
      %p104 = scmp.eq.s32.totalorder %s103, 0
      %s106 = sadd.s32 %s105, 1
      %s107 = scalar_select %p104, %s105, %s106
      %p110 = pneg %p104
      %p111 = scmp.eq.s32.totalorder %s15, 3
      %p112 = por %p110, %p111
      %p113 = scmp.ne.s32.totalorder %s105, %s108
      %p114 = scmp.eq.s32.totalorder %s15, 0
      %p115 = por %p113, %p114
      %p116 = scmp.ne.s32.totalorder %s105, %s108
      %p117 = scmp.eq.s32.totalorder %s20, 3
      %p118 = por %p116, %p117
      %p119 = scmp.ne.s32.totalorder %s108, %s109
      %p120 = scmp.eq.s32.totalorder %s20, 0
      %p121 = por %p119, %p120
      %p122 = scmp.ne.s32.totalorder %s108, %s109
      %p123 = scmp.eq.s32.totalorder %s21, 3
      %p124 = por %p122, %p123
      %p126 = scmp.ne.s32.totalorder %s109, %s125
      %p127 = scmp.eq.s32.totalorder %s21, 0
      %p128 = por %p126, %p127
      %p129 = scmp.le.s32.totalorder 1, %s15
      %p130 = scmp.lt.s32.totalorder %s15, 5
      %p131 = pnand %p129, %p130
      %p132 = pneg %p131
      // Predicated region
      $region9: #{tpu_custom_call.1} parent=5 // pred_check
        _
      $region10: #{tpu_custom_call.1} parent=5 // pred_check_branch
        %134 = sbr.rel (%p131) target = $region12
      $region11: #{tpu_custom_call.1} parent=5 // pred_region
        %s135 = ssub.s32 %s15, 1
      $region12: #{tpu_custom_call.1} parent=5 // pred_fallthru
        _
      %p136 = scmp.lt.s32.totalorder %s15, 4
      // Predicated region
      $region13: #{tpu_custom_call.1} parent=5 // pred_check
        %p137 = pneg %p136
      $region14: #{tpu_custom_call.1} parent=5 // pred_check_branch
        %139 = sbr.rel (%p137) target = $region16
      $region15: #{tpu_custom_call.1} parent=5 // pred_region
        // Predicated region
        $region17: #{tpu_custom_call.1} parent=15 // pred_check
          %p140 = pneg %p55
        $region18: #{tpu_custom_call.1} parent=15 // pred_check_branch
          %142 = sbr.rel (%p140) target = $region20
        $region19: #{tpu_custom_call.1} parent=15 // pred_region
          %s143 = sand.u32 %s45, 1
          %s144 = scalar_lea.sflag [#allocation4], %s143
          %s145 = sand.u32 %s45, 1
          %s146 = smul.addr %s145, 8
          %s147 = scalar_lea.vmem [#allocation3], %s146
          %s148 = smul.u32 %s22, 4
          %s149 = sadd.s32 %s148, %s23
          %p150 = scmp.lt.s32.totalorder %s149, 3
          %s151 = scalar_select %p150, %s149, 3
          %s153 = ssub.s32 128, 128
          %154 = vsyncadd %s144, %s153
          %s155 = smul.addr %s151, 128
          %s156 = scalar_lea.hbm %s0, %s155
          %s158 = sshll.u32 %s147, 4
          %s159 = int_to_ptr.vmem [resolvable:$true] %s158
          %161 = dma.hbm_to_vmem [thread:$0]  %s156, 128, %s159, %s144
        $region20: #{tpu_custom_call.1} parent=15 // pred_fallthru
          _
        // Predicated region
        $region21: #{tpu_custom_call.1} parent=15 // pred_check
          %p162 = pneg %p89
        $region22: #{tpu_custom_call.1} parent=15 // pred_check_branch
          %164 = sbr.rel (%p162) target = $region24
        $region23: #{tpu_custom_call.1} parent=15 // pred_region
          %s165 = sand.u32 %s79, 1
          %s166 = scalar_lea.sflag [#allocation7], %s165
          %s167 = sand.u32 %s79, 1
          %s168 = smul.addr %s167, 8
          %s169 = scalar_lea.vmem [#allocation6], %s168
          %s170 = smul.u32 %s22, 4
          %s171 = sadd.s32 %s170, %s23
          %p172 = scmp.lt.s32.totalorder %s171, 3
          %s173 = scalar_select %p172, %s171, 3
          %s175 = ssub.s32 128, 128
          %176 = vsyncadd %s166, %s175
          %s177 = smul.addr %s173, 128
          %s178 = scalar_lea.hbm %s1, %s177
          %s180 = sshll.u32 %s169, 4
          %s181 = int_to_ptr.vmem [resolvable:$true] %s180
          %183 = dma.hbm_to_vmem [thread:$0]  %s178, 128, %s181, %s166
        $region24: #{tpu_custom_call.1} parent=15 // pred_fallthru
          _
      $region16: #{tpu_custom_call.1} parent=5 // pred_fallthru
        _
      %p184 = scmp.le.s32.totalorder 1, %s15
      %p185 = scmp.lt.s32.totalorder %s15, 5
      %p186 = pnand %p184, %p185
      %p187 = pneg %p186
      // Predicated region
      $region25: #{tpu_custom_call.1} parent=5 // pred_check
        _
      $region26: #{tpu_custom_call.1} parent=5 // pred_check_branch
        %189 = sbr.rel (%p186) target = $region28
      $region27: #{tpu_custom_call.1} parent=5 // pred_region
        %s190 = ssub.s32 %s15, 1
        %s191 = sand.u32 %s48, 1
        %s192 = scalar_lea.sflag [#allocation4], %s191
        %s193 = sand.u32 %s48, 1
        %s194 = smul.addr %s193, 8
        %s195 = scalar_lea.vmem [#allocation3], %s194
        // Predicated region
        $region29: #{tpu_custom_call.1} parent=27 // pred_check
          %p196 = pneg %p61
        $region30: #{tpu_custom_call.1} parent=27 // pred_check_branch
          %198 = sbr.rel (%p196) target = $region32
        $region31: #{tpu_custom_call.1} parent=27 // pred_region
          %199 = dma.done %s192, 128
        $region32: #{tpu_custom_call.1} parent=27 // pred_fallthru
          _
        %s200 = sand.u32 %s82, 1
        %s201 = scalar_lea.sflag [#allocation7], %s200
        %s202 = sand.u32 %s82, 1
        %s203 = smul.addr %s202, 8
        %s204 = scalar_lea.vmem [#allocation6], %s203
        // Predicated region
        $region33: #{tpu_custom_call.1} parent=27 // pred_check
          %p205 = pneg %p95
        $region34: #{tpu_custom_call.1} parent=27 // pred_check_branch
          %207 = sbr.rel (%p205) target = $region36
        $region35: #{tpu_custom_call.1} parent=27 // pred_region
          %208 = dma.done %s201, 128
        $region36: #{tpu_custom_call.1} parent=27 // pred_fallthru
          _
        %s209 = sand.u32 %s48, 1
        %s210 = scalar_lea.sflag [#allocation4], %s209
        %s211 = sand.u32 %s48, 1
        %s212 = smul.addr %s211, 8
        %s213 = scalar_lea.vmem [#allocation3], %s212
        %p214 = pneg %p61
        %p215 = pneg %p58
        %s216 = sand.u32 %s82, 1
        %s217 = scalar_lea.sflag [#allocation7], %s216
        %s218 = sand.u32 %s82, 1
        %s219 = smul.addr %s218, 8
        %s220 = scalar_lea.vmem [#allocation6], %s219
        %p221 = pneg %p95
        %p222 = pneg %p92
        %p223 = pneg %p121
        %p224 = pneg %p118
        %s225 = smul.u32 %s24, 4
        %s226 = sadd.s32 %s225, %s25
        %p227 = scmp.lt.s32.totalorder %s226, 3
        %s228 = scalar_select %p227, %s226, 3
        %s229 = smul.u32 %s24, 4
        %s230 = sadd.s32 %s229, %s25
        %p231 = scmp.lt.s32.totalorder %s230, 3
        %s232 = scalar_select %p231, %s230, 3
        %p233 = scmp.eq.s32.totalorder %s25, 0
        // Predicated region
        $region37: #{tpu_custom_call.1} parent=27 // pred_check
          %p234 = pneg %p233
        $region38: #{tpu_custom_call.1} parent=27 // pred_check_branch
          %236 = sbr.rel (%p234) target = $region40
        $region39: #{tpu_custom_call.1} parent=27 // pred_region
          %s237 = scalar_lea.smem [#allocation2], 0
          %238 = sst [smem:[%s237]] 0.0
          %s239 = scalar_lea.smem [#allocation2], 1
          %240 = sst [smem:[%s239]] 0.0
        $region40: #{tpu_custom_call.1} parent=27 // pred_fallthru
          _
        %v241 = vld [vmem:[%s195] sm:$0xff]
        %v242 = vld [vmem:[%s204] sm:$0xff]
        %v243 = vlaneseq
        %v244 = vand.u32 %v243, 127
        %vm245 = vcmp.lt.s32.totalorder %v244, 96
        %v246 = vsub.f32 %v242, %v241
        %v247 = vmul.f32 %v246, %v246
        %v248 = vsel %vm245, 1, 0
        %vm249 = vcmp.eq.s32.totalorder %v248, 1
        %v250 = vsel %vm249, %v247, 0.0
        %v251 = vsel %vm249, 0.5, %v242
        %v252 = vlog2.pop %v251
        %v253 = vmul.f32 %v252, 0.6931472
        %v254 = vmax.f32 %v253, -100.0
        %v255 = vsub.f32 1.0, %v251
        %v256 = vlog2.pop %v255
        %v257 = vmul.f32 %v256, 0.6931472
        %v258 = vmax.f32 %v257, -100.0
        %v259 = vsub.f32 %v254, %v258
        %v260 = vmul.f32 %v241, %v259
        %v261 = vadd.f32 %v260, %v258
        %v262 = vsub.f32 0.0, %v261
        %v263 = vsel %vm249, 0.0, %v262
        %264 = vadd.xlane.f32.xlu0 %v250
        %v265 = vpop.xlane.xlu0 %264
        %v266 = vrot.slane %v265, 4
        %v267 = vadd.f32 %v265, %v266
        %v268 = vrot.slane %v267, 2
        %v269 = vadd.f32 %v267, %v268
        %v270 = vrot.slane %v269, 1
        %v271 = vadd.f32 %v269, %v270
        %s272 = vtos %v271
        %273 = vadd.xlane.f32.xlu0 %v263
        %v274 = vpop.xlane.xlu0 %273
        %v275 = vrot.slane %v274, 4
        %v276 = vadd.f32 %v274, %v275
        %v277 = vrot.slane %v276, 2
        %v278 = vadd.f32 %v276, %v277
        %v279 = vrot.slane %v278, 1
        %v280 = vadd.f32 %v278, %v279
        %s281 = vtos %v280
        %s282 = sld [smem:[#allocation2]]
        %s283 = sadd.f32 %s282, %s272
        %s284 = scalar_lea.smem [#allocation2], 0
        %285 = sst [smem:[%s284]] %s283
        %s286 = sld [smem:[#allocation2 + $0x1]]
        %s287 = sadd.f32 %s286, %s281
        %s288 = scalar_lea.smem [#allocation2], 1
        %289 = sst [smem:[%s288]] %s287
        %p290 = scmp.eq.s32.totalorder %s25, 3
        // Predicated region
        $region41: #{tpu_custom_call.1} parent=27 // pred_check
          %p291 = pneg %p290
        $region42: #{tpu_custom_call.1} parent=27 // pred_check_branch
          %293 = sbr.rel (%p291) target = $region44
        $region43: #{tpu_custom_call.1} parent=27 // pred_region
          %s294 = sld [smem:[#allocation2]]
          %s295 = smul.f32 %s294, 0.00032552084
          %s296 = sld [smem:[#allocation2 + $0x1]]
          %s297 = smul.f32 %s296, 0.0009765625
          %s298 = sadd.f32 %s295, %s297
          %s299 = scalar_lea.smem [#allocation8], 0
          %300 = sst [smem:[%s299]] %s298
        $region44: #{tpu_custom_call.1} parent=27 // pred_fallthru
          _
        // Predicated region
        $region45: #{tpu_custom_call.1} parent=27 // pred_check
          %p301 = pneg %p118
        $region46: #{tpu_custom_call.1} parent=27 // pred_check_branch
          %303 = sbr.rel (%p301) target = $region48
        $region47: #{tpu_custom_call.1} parent=27 // pred_region
          %s305 = ssub.s32 16, 16
          %306 = vsyncadd [#allocation5], %s305
          %s307 = smul.addr %s24, 16
          %s308 = scalar_lea.hbm %s2, %s307
          %311 = dma.smem_to_hbm [#allocation8], 16, %s308, [#allocation5]
        $region48: #{tpu_custom_call.1} parent=27 // pred_fallthru
          _
        // Predicated region
        $region49: #{tpu_custom_call.1} parent=27 // pred_check
          %p312 = pneg %p118
        $region50: #{tpu_custom_call.1} parent=27 // pred_check_branch
          %314 = sbr.rel (%p312) target = $region52
        $region51: #{tpu_custom_call.1} parent=27 // pred_region
          %315 = dma.done [#allocation5], 16
        $region52: #{tpu_custom_call.1} parent=27 // pred_fallthru
          _
        %316 = sfence
      $region28: #{tpu_custom_call.1} parent=5 // pred_fallthru
        _
      %p317 = scmp.le.s32.totalorder 2, %s15
      // Predicated region
      $region53: #{tpu_custom_call.1} parent=5 // pred_check
        %p318 = pneg %p317
      $region54: #{tpu_custom_call.1} parent=5 // pred_check_branch
        %320 = sbr.rel (%p318) target = $region56
      $region55: #{tpu_custom_call.1} parent=5 // pred_region
        %s321 = ssub.s32 %s15, 2
      $region56: #{tpu_custom_call.1} parent=5 // pred_fallthru
        _
    $region6: #{tpu_custom_call.1} parent=1 // loop_footer
      %s19 = sadd.s32 1, %s15
    $region7: #{tpu_custom_call.1} parent=1 // loop_footer_branch
      %14 = sbr.rel target = $region3
    $region8: #{tpu_custom_call.1} parent=1 // loop_exit
      _
    %322 = vsyncpa [#allocation4], 1
    %s323 = scalar_lea.sflag [#allocation4], 1
    %324 = vsyncpa %s323, 1
    %325 = vsyncpa [#allocation7], 1
    %s326 = scalar_lea.sflag [#allocation7], 1
    %327 = vsyncpa %s326, 1
    %328 = vsyncpa [#allocation5], 1
    %s329 = scalar_lea.sflag [#allocation5], 1
    %330 = vsyncpa %s329, 1

</llo_original>
